<compile_context>
chip_gen: v7x
topology: tpu7x:2x2x1
jax: 0.10.0
libtpu: 0.0.40
codegen_flags: <defaults>
</compile_context>

<pallas_src>
import functools

import jax
import jax.numpy as jnp
from jax.experimental import pallas as pl
from jax.experimental.pallas import tpu as pltpu

_IGNORE_INDEX = 0


def _round_up(x, m):
    return -(-x // m) * m


def _per_row_focal(x, t, *, gamma, gamma_is_int):
    """Per-row focal loss column. x: (T, C) logits, t: (T, 1) int32 targets."""
    x = x.astype(jnp.float32)
    # Numerically stable softmax pieces over the class (lane) axis.
    m = jnp.max(x, axis=-1, keepdims=True)
    shifted = x - m                                          # (T, C)
    e = jnp.exp(shifted)                                     # (T, C) -- the only exp
    denom = jnp.sum(e, axis=-1, keepdims=True)               # (T, 1)
    # One-hot select of the target class via lane-iota compare (no gather).
    classes = jax.lax.broadcasted_iota(jnp.int32, x.shape, 1)
    one_hot = (classes == t).astype(jnp.float32)             # (T, C)
    sel_shift = jnp.sum(shifted * one_hot, axis=-1, keepdims=True)  # x_t - m
    sel_exp = jnp.sum(e * one_hot, axis=-1, keepdims=True)          # exp(x_t - m)
    # pt = softmax(x)_t without a second exp; approx=True would move the
    # divide fully onto the cheap EUP vrcp path at ~1e-4 rel. error in pt.
    pt = sel_exp * pl.reciprocal(denom, approx=False)
    # CrossEntropyLoss(ignore_index=0, reduction='none') zeroes ignored rows.
    # Padded rows are given target 0, so they contribute exactly 0 as well.
    valid = (t != _IGNORE_INDEX).astype(jnp.float32)
    ce = (jnp.log(denom) - sel_shift) * valid                # = -log_softmax(x)_t
    u = jnp.maximum(1.0 - pt, 0.0)                           # clamp fp noise (pt ~ 1+eps)
    if gamma_is_int:
        w = jnp.ones_like(u)
        for _ in range(int(gamma)):                          # static, small (gamma=2)
            w = w * u
    else:
        w = jnp.power(u, gamma)
    return w * ce                                            # (T, 1)


def _focal_sum_kernel(emis_ref, tgt_ref, psum_ref, *, gamma, gamma_is_int):
    focal = _per_row_focal(emis_ref[...], tgt_ref[...], gamma=gamma,
                           gamma_is_int=gamma_is_int)
    psum_ref[0, 0] = jnp.sum(focal)                          # per-tile partial sum


def _focal_rows_lane_dense_kernel(emis_ref, tgt_ref, rows_ref, *, gamma,
                                  gamma_is_int):
    focal = _per_row_focal(emis_ref[...], tgt_ref[...], gamma=gamma,
                           gamma_is_int=gamma_is_int)        # (T, 1)
    # One XLU relayout per tile instead of T/8 masked lane-width-1 stores and
    # a narrow HBM writeback (lane-dense out_spec is the big layout lever).
    rows_ref[...] = jnp.transpose(focal, (1, 0))             # (1, T)


def _focal_rows_col_kernel(emis_ref, tgt_ref, rows_ref, *, gamma, gamma_is_int):
    # Known-good fallback layout (lane-width-1 stores) if the relayout above
    # does not lower on the local Mosaic build.
    rows_ref[...] = _per_row_focal(emis_ref[...], tgt_ref[...], gamma=gamma,
                                   gamma_is_int=gamma_is_int)


def _vmem_budget():
    """(footprint budget, vmem_limit_bytes), generation-aware."""
    cap = 64 << 20                                           # safe default (v7x)
    try:
        cap = int(pltpu.get_tpu_info().vmem_capacity_bytes)
    except Exception:
        pass
    # Keep >=16 MiB headroom for compiler-internal scratch; never ask for more
    # than 96 MiB even on 128 MiB parts.
    limit = max(16 << 20, min(cap - (16 << 20), 96 << 20))
    budget = max(8 << 20, limit - (8 << 20))
    return budget, limit


def _pick_tile_n(n, c, itemsize, budget_bytes, reduction):
    c_pad = max(_round_up(c, 128), 128)                      # lane padding
    out_per_row = 0 if reduction in ("sum", "mean") else 2 * 128 * 4
    per_row = (2 * c_pad * itemsize        # double-buffered emissions block
               + 2 * 128 * 4               # double-buffered (tile,1) i32 targets (lane-padded)
               + 6 * c_pad * 4             # f32 compute temporaries (+ bf16 upcast)
               + out_per_row)              # double-buffered output block
    tile = budget_bytes // per_row
    tile = int(max(8, min(4096, (tile // 8) * 8)))
    if n > 8:
        # Keep >=2 tiles so the 'parallel' axis can be split across the two
        # TensorCores on v7x megacore; also don't over-pad tiny N.
        tile = min(tile, _round_up(-(-n // 2), 8))
    else:
        tile = 8
    return tile


def _cost(n, c, itemsize, out_bytes):
    return pl.CostEstimate(flops=15 * n * c,
                           transcendentals=n * (c + 2),
                           bytes_accessed=n * c * itemsize + n * 4 + out_bytes)


def focal_loss(emissions, targets, num_labels, *, alpha=None, gamma=2.0,
               reduction="sum"):
    """JAX/Pallas equivalent of FocalLoss.forward (alpha=None path)."""
    # TODO(synk): alpha class-weight gather not implemented (module default alpha=None).
    assert alpha is None
    emissions = emissions.reshape(-1, num_labels)            # keep dtype (bf16 ok)
    targets = targets.reshape(-1).astype(jnp.int32)
    n, c = emissions.shape
    itemsize = jnp.dtype(emissions.dtype).itemsize

    gamma_is_int = float(gamma).is_integer()
    budget, vmem_limit = _vmem_budget()
    tile_n = _pick_tile_n(n, c, itemsize, budget, reduction)
    num_tiles = pl.cdiv(n, tile_n)
    n_pad = num_tiles * tile_n
    if n_pad != n:
        emissions = jnp.pad(emissions, ((0, n_pad - n), (0, 0)))
        targets = jnp.pad(targets, (0, n_pad - n))           # pad value 0 == ignore_index
    targets_2d = targets.reshape(n_pad, 1)

    # TODO(synk): targets are DMA'd as a (tile_n, 1) int32 block (lane-padded in
    # VMEM, cost included in the budget); a lane-dense (1, tile_n) load needs an
    # in-kernel relayout to a column and is left out for robustness.
    # TODO(synk): small-C lane packing (k=128//C rows per vreg row) and a
    # class-chunked online-logsumexp axis for vocab-scale C are not implemented.
    in_specs = [
        pl.BlockSpec((tile_n, c), lambda i: (i, 0)),
        pl.BlockSpec((tile_n, 1), lambda i: (i, 0)),
    ]
    cparams = pltpu.CompilerParams(dimension_semantics=("parallel",),
                                   vmem_limit_bytes=vmem_limit)

    if reduction in ("sum", "mean"):
        kernel = functools.partial(_focal_sum_kernel, gamma=gamma,
                                   gamma_is_int=gamma_is_int)
        psums = pl.pallas_call(
            kernel,
            out_shape=jax.ShapeDtypeStruct((num_tiles, 1), jnp.float32),
            grid=(num_tiles,),
            in_specs=in_specs,
            out_specs=pl.BlockSpec((1, 1), lambda i: (i, 0),
                                   memory_space=pltpu.MemorySpace.SMEM),
            compiler_params=cparams,
            cost_estimate=_cost(n_pad, c, itemsize, 4 * num_tiles),
        )(emissions, targets_2d)
        total = jnp.sum(psums)
        if reduction == "mean":
            # Matches the module: focal_loss.mean() averages over ALL rows
            # (ignored rows included), i.e. divide by n, not the valid count.
            return total / n
        return total

    # reduction == 'none'
    cost = _cost(n_pad, c, itemsize, 4 * n_pad)
    try:
        kernel = functools.partial(_focal_rows_lane_dense_kernel, gamma=gamma,
                                   gamma_is_int=gamma_is_int)
        rows = pl.pallas_call(
            kernel,
            out_shape=jax.ShapeDtypeStruct((num_tiles, tile_n), jnp.float32),
            grid=(num_tiles,),
            in_specs=in_specs,
            out_specs=pl.BlockSpec((1, tile_n), lambda i: (i, 0)),
            compiler_params=cparams,
            cost_estimate=cost,
        )(emissions, targets_2d)
        return rows.reshape(-1)[:n]
    except Exception:
        # Fallback: previous known-good (n_pad, 1) column layout; slower stores
        # but guaranteed to lower.
        kernel = functools.partial(_focal_rows_col_kernel, gamma=gamma,
                                   gamma_is_int=gamma_is_int)
        rows = pl.pallas_call(
            kernel,
            out_shape=jax.ShapeDtypeStruct((n_pad, 1), jnp.float32),
            grid=(num_tiles,),
            in_specs=in_specs,
            out_specs=pl.BlockSpec((tile_n, 1), lambda i: (i, 0)),
            compiler_params=cparams,
            cost_estimate=cost,
        )(emissions, targets_2d)
        return rows[:n, 0]


def _focal_loss_ref(emissions, targets, num_labels, gamma=2.0, reduction="sum"):
    """Pure-JAX reference mirroring the PyTorch module."""
    emissions = emissions.reshape(-1, num_labels).astype(jnp.float32)
    targets = targets.reshape(-1).astype(jnp.int32)
    log_probs = jax.nn.log_softmax(emissions, axis=-1)
    one_hot = jax.nn.one_hot(targets, num_labels, dtype=jnp.float32)
    logpt = jnp.sum(log_probs * one_hot, axis=-1)
    ce = -logpt * (targets != 0)                             # ignore_index=0
    pt = jnp.exp(logpt)
    focal = ((1.0 - pt) ** gamma) * ce
    if reduction == "sum":
        return jnp.sum(focal)
    if reduction == "mean":
        return jnp.mean(focal)
    return focal


if __name__ == "__main__":
    num_labels = 16
    batch = 8
    gamma = 2.0

    key = jax.random.PRNGKey(0)
    k_e, k_t = jax.random.split(key)
    emissions = jax.random.normal(k_e, (batch, num_labels), dtype=jnp.float32)
    targets = jax.random.randint(k_t, (batch,), 0, num_labels, dtype=jnp.int32)
    targets = targets.at[0].set(0)                           # exercise ignore_index=0

    ok = True
    for red in ("sum", "mean", "none"):
        out = jax.block_until_ready(
            focal_loss(emissions, targets, num_labels, gamma=gamma, reduction=red))
        ref = _focal_loss_ref(emissions, targets, num_labels, gamma=gamma,
                              reduction=red)
        ok = ok and bool(jnp.allclose(out, ref, rtol=1e-5, atol=1e-5))

    assert ok
    print("KERNEL_OK")
</pallas_src>

<mosaic_0001>
module attributes {stable_mosaic.version = 11 : i64} {
  func.func @_focal_sum_kernel(%arg0: i32, %arg1: memref<8x16xf32, #tpu.memory_space<vmem>>, %arg2: memref<8x1xi32, #tpu.memory_space<vmem>>, %arg3: memref<1x1xf32, #tpu.memory_space<smem>>) attributes {dimension_semantics = [#tpu.dimension_semantics<parallel>], iteration_bounds = array<i64: 1>, scalar_prefetch = 0 : i64, scratch_operands = 0 : i64, tpu.core_type = #tpu.core_type<tc>, window_params = [{transform_indices = @transform_0, window_bounds = array<i64: 8, 16>}, {transform_indices = @transform_1, window_bounds = array<i64: 8, 1>}, {transform_indices = @transform_2, window_bounds = array<i64: 1, 1>}]} {
    %c0 = arith.constant 0 : index
    %c0_0 = arith.constant 0 : index
    %0 = vector.load %arg1[%c0, %c0_0] : memref<8x16xf32, #tpu.memory_space<vmem>>, vector<8x16xf32>
    %c0_1 = arith.constant 0 : index
    %c0_2 = arith.constant 0 : index
    %1 = vector.load %arg2[%c0_1, %c0_2] : memref<8x1xi32, #tpu.memory_space<vmem>>, vector<8x1xi32>
    %cst = arith.constant dense<0xFF800000> : vector<8xf32>
    %2 = vector.multi_reduction <maximumf>, %0, %cst [1] : vector<8x16xf32> to vector<8xf32>
    %3 = vector.shape_cast %2 : vector<8xf32> to vector<8x1xf32>
    %4 = vector.broadcast %3 : vector<8x1xf32> to vector<8x16xf32>
    %5 = arith.subf %0, %4 : vector<8x16xf32>
    %6 = math.exp %5 : vector<8x16xf32>
    %cst_3 = arith.constant dense<0.000000e+00> : vector<8xf32>
    %7 = vector.multi_reduction <add>, %6, %cst_3 [1] : vector<8x16xf32> to vector<8xf32>
    %8 = vector.shape_cast %7 : vector<8xf32> to vector<8x1xf32>
    %9 = tpu.iota {dimensions = array<i32: 1>} : vector<8x16xi32>
    %10 = vector.broadcast %1 : vector<8x1xi32> to vector<8x16xi32>
    %11 = arith.cmpi eq, %9, %10 : vector<8x16xi32>
    %12 = arith.extui %11 : vector<8x16xi1> to vector<8x16xi32>
    %13 = arith.sitofp %12 : vector<8x16xi32> to vector<8x16xf32>
    %14 = arith.mulf %5, %13 : vector<8x16xf32>
    %cst_4 = arith.constant dense<0.000000e+00> : vector<8xf32>
    %15 = vector.multi_reduction <add>, %14, %cst_4 [1] : vector<8x16xf32> to vector<8xf32>
    %16 = vector.shape_cast %15 : vector<8xf32> to vector<8x1xf32>
    %17 = arith.mulf %6, %13 : vector<8x16xf32>
    %cst_5 = arith.constant dense<0.000000e+00> : vector<8xf32>
    %18 = vector.multi_reduction <add>, %17, %cst_5 [1] : vector<8x16xf32> to vector<8xf32>
    %19 = vector.shape_cast %18 : vector<8xf32> to vector<8x1xf32>
    %20 = tpu.reciprocal %8 : vector<8x1xf32> -> vector<8x1xf32>
    %21 = arith.mulf %19, %20 : vector<8x1xf32>
    %c0_i32 = arith.constant 0 : i32
    %22 = vector.broadcast %c0_i32 : i32 to vector<8x1xi32>
    %23 = arith.cmpi ne, %1, %22 : vector<8x1xi32>
    %24 = arith.extui %23 : vector<8x1xi1> to vector<8x1xi32>
    %25 = arith.sitofp %24 : vector<8x1xi32> to vector<8x1xf32>
    %26 = math.log %8 : vector<8x1xf32>
    %27 = arith.subf %26, %16 : vector<8x1xf32>
    %28 = arith.mulf %27, %25 : vector<8x1xf32>
    %cst_6 = arith.constant 1.000000e+00 : f32
    %29 = vector.broadcast %cst_6 : f32 to vector<8x1xf32>
    %30 = arith.subf %29, %21 : vector<8x1xf32>
    %cst_7 = arith.constant 0.000000e+00 : f32
    %31 = vector.broadcast %cst_7 : f32 to vector<8x1xf32>
    %32 = arith.maximumf %30, %31 : vector<8x1xf32>
    %cst_8 = arith.constant 1.000000e+00 : f32
    %33 = vector.broadcast %cst_8 : f32 to vector<8x1xf32>
    %34 = arith.mulf %33, %32 : vector<8x1xf32>
    %35 = arith.mulf %34, %32 : vector<8x1xf32>
    %36 = arith.mulf %35, %28 : vector<8x1xf32>
    %37 = vector.shape_cast %36 : vector<8x1xf32> to vector<1x8x1xf32>
    %cst_9 = arith.constant dense<0.000000e+00> : vector<1xf32>
    %38 = vector.multi_reduction <add>, %37, %cst_9 [1, 2] : vector<1x8x1xf32> to vector<1xf32>
    %39 = vector.shape_cast %38 : vector<1xf32> to vector<1x1x1xf32>
    %40 = vector.extract %39[0, 0, 0] : f32 from vector<1x1x1xf32>
    %c0_10 = arith.constant 0 : index
    %c0_11 = arith.constant 0 : index
    %41 = memref.load %arg3[%c0_10, %c0_11] : memref<1x1xf32, #tpu.memory_space<smem>>
    memref.store %40, %arg3[%c0_10, %c0_11] : memref<1x1xf32, #tpu.memory_space<smem>>
    return
  }
  func.func @transform_0(%arg0: i32) -> (i32, i32) {
    %c0_i32 = arith.constant 0 : i32
    %c0_i32_0 = arith.constant 0 : i32
    return %arg0, %c0_i32 : i32, i32
  }
  func.func @transform_1(%arg0: i32) -> (i32, i32) {
    %c0_i32 = arith.constant 0 : i32
    %c0_i32_0 = arith.constant 0 : i32
    return %arg0, %c0_i32 : i32, i32
  }
  func.func @transform_2(%arg0: i32) -> (i32, i32) {
    %c0_i32 = arith.constant 0 : i32
    %c0_i32_0 = arith.constant 0 : i32
    return %arg0, %c0_i32 : i32, i32
  }
}

</mosaic_0001>

<llo_original>
// kernel: tpu_custom_call.1
$region0: #{tpu_custom_call.1}
  #allocation0 [shape = 'u32[]', space=smem, size = 0x4, offset = 0x4, fixed_abs, tag = 'smem constant byte address 0x4 - core index']
  #allocation1 [shape = 'u32[144,128]{1,0:T(1,128)}', space=vmem, size = 0x12000, scoped, tag = 'internal scratch']
  %s0 = inlined_call_operand.vmem [shape: f32[8,16], index: 0, kind: input, shape index: {}]
  %s1 = inlined_call_operand.vmem [shape: s32[8,1], index: 1, kind: input, shape index: {}]
  %s2 = inlined_call_operand.hbm [shape: f32[1,1], index: 2, kind: output, shape index: {}]
  %s3 = sld [smem:[#allocation0]]
  $region18: #{tpu_custom_call.1} parent=0
    _
  %s5 = ssub.s32 1, %s3
  %s6 = scalar_select 0, %s5, %s3
  $region1: #{tpu_custom_call.1} parent=0
    #allocation2 [shape = 'u8[512]{0}', space=smem, size = 0x200, scoped, tag = 'output window, operand 0, single buffered']
    #allocation3 [shape = 's32[1]{0}', space=sflag, size = 0x4, scoped, tag = 'scoped memory for tpu_custom_call.1']
    %7 = vsyncpa [#allocation3], 0
    // Predicated region
    $region2: #{tpu_custom_call.1} parent=1 // pred_check
      _
    $region3: #{tpu_custom_call.1} parent=1 // pred_check_branch
      %9 = sbr.rel (0) target = $region5
    $region4: #{tpu_custom_call.1} parent=1 // pred_region
      _
    $region5: #{tpu_custom_call.1} parent=1 // pred_fallthru
      _
    // Predicated region
    $region6: #{tpu_custom_call.1} parent=1 // pred_check
      _
    $region7: #{tpu_custom_call.1} parent=1 // pred_check_branch
      %11 = sbr.rel (0) target = $region9
    $region8: #{tpu_custom_call.1} parent=1 // pred_region
      _
    $region9: #{tpu_custom_call.1} parent=1 // pred_fallthru
      _
    %v12 = vld [vmem:[%s0] sm:$0xff]
    %v13 = vld [vmem:[%s1] sm:$0xff]
    %vm14 = vcmask 130048
    %v15 = vsel %vm14, %v12, -inf
    %16 = vmax.xlane.f32.xlu0 %v15
    %v17 = vpop.xlane.xlu0 %16
    %v18 = vsub.f32 %v12, %v17
    %v19 = vmul.f32 %v18, 1.442695
    %v20 = vpow.pop %v19
    %v21 = vsel %vm14, %v20, 0.0
    %22 = vadd.xlane.f32.xlu0 %v21
    %v23 = vpop.xlane.xlu0 %22
    %v24 = vlaneseq
    %v25 = vand.u32 %v24, 127
    %26 = vset.pattern.permute.xlu0 0
    %27 = vperm.xlu0 %26, %v13
    %v28 = vpop.permute.xlu0 %27
    %vm29 = vcmp.eq.s32.totalorder %v25, %v28
    %v30 = vsel %vm29, 1, 0
    %v31 = vcvt.s32.f32 %v30
    %v32 = vmul.f32 %v18, %v31
    %v33 = vsel %vm14, %v32, 0.0
    %34 = vadd.xlane.f32.xlu0 %v33
    %v35 = vpop.xlane.xlu0 %34
    %v36 = vmul.f32 %v20, %v31
    %v37 = vsel %vm14, %v36, 0.0
    %38 = vadd.xlane.f32.xlu0 %v37
    %v39 = vpop.xlane.xlu0 %38
    %v40 = vrcp.pop %v23
    %v41 = vmul.f32 %v39, %v40
    %vm42 = vcmp.ne.s32.totalorder %v13, 0
    %v43 = vsel %vm42, 1, 0
    %v44 = vcvt.s32.f32 %v43
    %v45 = vlog2.pop %v23
    %v46 = vmul.f32 %v45, 0.6931472
    %v47 = vsub.f32 %v46, %v35
    %v48 = vmul.f32 %v47, %v44
    %v49 = vsub.f32 1.0, %v41
    %v50 = vmax.f32 %v49, 0.0
    %v51 = vmul.f32 %v50, %v50
    %v52 = vmul.f32 %v51, %v48
    %vm53 = vcmask 7168
    %v54 = vsel %vm53, %v52, 0.0
    %55 = vadd.xlane.f32.xlu0 %v54
    %v56 = vpop.xlane.xlu0 %55
    %v57 = vrot.slane %v56, 4
    %v58 = vadd.f32 %v56, %v57
    %v59 = vrot.slane %v58, 2
    %v60 = vadd.f32 %v58, %v59
    %v61 = vrot.slane %v60, 1
    %v62 = vadd.f32 %v60, %v61
    %s63 = vtos %v62
    %s64 = scalar_lea.smem [#allocation2], 0
    %65 = sst [smem:[%s64]] %s63
    // Predicated region
    $region10: #{tpu_custom_call.1} parent=1 // pred_check
      _
    $region11: #{tpu_custom_call.1} parent=1 // pred_check_branch
      %67 = sbr.rel (0) target = $region13
    $region12: #{tpu_custom_call.1} parent=1 // pred_region
      %s69 = ssub.s32 16, 16
      %70 = vsyncadd [#allocation3], %s69
      %73 = dma.smem_to_hbm [#allocation2], 16, %s2, [#allocation3]
    $region13: #{tpu_custom_call.1} parent=1 // pred_fallthru
      _
    // Predicated region
    $region14: #{tpu_custom_call.1} parent=1 // pred_check
      _
    $region15: #{tpu_custom_call.1} parent=1 // pred_check_branch
      %75 = sbr.rel (0) target = $region17
    $region16: #{tpu_custom_call.1} parent=1 // pred_region
      %76 = dma.done [#allocation3], 16
    $region17: #{tpu_custom_call.1} parent=1 // pred_fallthru
      _
    %77 = sfence
    %78 = vsyncpa [#allocation3], 1

</llo_original>
